<compile_context>
chip_gen: v7x
topology: tpu7x:2x2x1
jax: 0.10.0
libtpu: 0.0.40
codegen_flags: <defaults>
</compile_context>

<pallas_src>
import jax
import jax.numpy as jnp
from jax.experimental import pallas as pl
from jax.experimental.pallas import tpu as pltpu


def _round_up(a, b):
    return ((a + b - 1) // b) * b


def _mlp_kernel(x_ref, w1_ref, b1_ref, w2_ref, b2_ref, o_ref, acc_ref):
    """Grid = (batch_tiles, vocab_tiles); axis 1 is the K reduction over the vocab."""
    k = pl.program_id(1)

    @pl.when(k == 0)
    def _init():
        acc_ref[...] = jnp.zeros_like(acc_ref)

    # Partial fc1: (block_m, block_k) @ (block_k, H), bf16 inputs, f32 MXU accumulation.
    acc_ref[...] += jnp.dot(x_ref[...], w1_ref[...], preferred_element_type=jnp.float32)

    @pl.when(k == pl.num_programs(1) - 1)
    def _finalize():
        # fc1 bias + ReLU, applied once after the full K reduction.
        h = jnp.maximum(acc_ref[...] + b1_ref[...], 0.0)
        # Dropout: eval/inference mode -> identity.
        # fc2: bf16 x bf16 -> f32 accumulate (runs once per batch tile).
        y = jnp.dot(h.astype(jnp.bfloat16), w2_ref[...],
                    preferred_element_type=jnp.float32) + b2_ref[...]
        o_ref[...] = y.astype(o_ref.dtype)


def prepare_params(w1, b1, w2, b2, *, block_k=4096):
    """One-time weight prep (padding + bf16 conversion), hoisted out of the per-call path.

    w1: (vocab, hidden), b1: (hidden,), w2: (hidden, out), b2: (out,)
    (i.e. PyTorch nn.Linear weights transposed).
    """
    V, H = w1.shape
    O = w2.shape[1]

    block_k = _round_up(block_k, 128)
    block_k = min(block_k, _round_up(V, 128))   # don't over-pad tiny vocabularies
    V_pad = _round_up(V, block_k)
    O_pad = _round_up(O, 128)                   # lane-dense output (unmasked stores)

    w1_p = jnp.zeros((V_pad, H), jnp.bfloat16).at[:V, :].set(w1.astype(jnp.bfloat16))
    b1_p = jnp.asarray(b1, jnp.float32).reshape(1, H)
    w2_p = jnp.zeros((H, O_pad), jnp.bfloat16).at[:, :O].set(w2.astype(jnp.bfloat16))
    b2_p = jnp.zeros((1, O_pad), jnp.float32).at[:1, :O].set(
        jnp.asarray(b2, jnp.float32).reshape(1, O))

    return dict(w1=w1_p, b1=b1_p, w2=w2_p, b2=b2_p,
                V=V, H=H, O=O, V_pad=V_pad, O_pad=O_pad, block_k=block_k)


def category_classifier_forward(x, params, *, block_m=None):
    """x: (B, vocab) float; params from prepare_params(). Returns (B, out) float32."""
    B, V = x.shape
    assert V == params["V"], "vocab size mismatch with prepared params"
    H, O = params["H"], params["O"]
    V_pad, O_pad, block_k = params["V_pad"], params["O_pad"], params["block_k"]

    # block_m: multiple of 16 (bf16 sublane packing). Keep small batches in ONE tile
    # (every extra batch tile re-streams all of W1); large batches feed up to 256 MXU rows.
    if block_m is None:
        block_m = min(256, _round_up(B, 16))
    block_m = max(16, _round_up(block_m, 16))
    B_pad = _round_up(B, block_m)

    # x streamed as bf16 (exact for small integer counts; halves x HBM traffic & VMEM).
    x_p = jnp.zeros((B_pad, V_pad), jnp.bfloat16).at[:B, :V].set(x.astype(jnp.bfloat16))

    grid = (B_pad // block_m, V_pad // block_k)

    # Rough double-buffered VMEM footprint; request headroom (well under physical on all gens).
    vmem_bytes = (2 * block_m * block_k * 2          # x tiles (bf16, double buffered)
                  + 2 * block_k * H * 2              # W1 tiles (bf16, double buffered)
                  + block_m * H * 4                  # f32 accumulator scratch
                  + 2 * block_m * O_pad * 4          # output tiles
                  + 2 * (H * 4 + H * O_pad * 2 + O_pad * 4)  # resident b1 / W2 / b2
                  + (2 << 20))                       # slack
    vmem_limit = int(min(max(vmem_bytes, 32 * 1024 * 1024), 48 * 1024 * 1024))

    out_padded = pl.pallas_call(
        _mlp_kernel,
        out_shape=jax.ShapeDtypeStruct((B_pad, O_pad), jnp.float32),
        grid_spec=pltpu.PrefetchScalarGridSpec(
            num_scalar_prefetch=0,
            grid=grid,
            in_specs=[
                pl.BlockSpec((block_m, block_k), lambda i, k: (i, k)),  # x tile (bf16)
                # TODO(synk): sweep pipeline_mode=pl.Buffered(3) here for deeper W1 prefetch.
                pl.BlockSpec((block_k, H), lambda i, k: (k, 0)),        # W1 tile (streamed)
                pl.BlockSpec((1, H), lambda i, k: (0, 0)),              # b1 (resident)
                pl.BlockSpec((H, O_pad), lambda i, k: (0, 0)),          # W2 (resident, bf16)
                pl.BlockSpec((1, O_pad), lambda i, k: (0, 0)),          # b2 (resident)
            ],
            out_specs=pl.BlockSpec((block_m, O_pad), lambda i, k: (i, 0)),
            scratch_shapes=[pltpu.VMEM((block_m, H), jnp.float32)],
        ),
        compiler_params=pltpu.CompilerParams(
            dimension_semantics=("parallel", "arbitrary"),
            vmem_limit_bytes=vmem_limit,
        ),
    )(x_p, params["w1"], params["b1"], params["w2"], params["b2"])

    # Padded batch rows hold ReLU(b1)@W2+b2 garbage; slice them off before returning.
    return out_padded[:B, :O]


def init_params(key, vocab_size, hidden_dim, output_dim):
    """Deterministic init mimicking nn.Linear's uniform(-1/sqrt(fan_in), 1/sqrt(fan_in))."""
    k1, k2, k3, k4 = jax.random.split(key, 4)
    bound1 = 1.0 / jnp.sqrt(vocab_size)
    bound2 = 1.0 / jnp.sqrt(hidden_dim)
    # Stored as (in_features, out_features) = PyTorch weight.T
    w1 = jax.random.uniform(k1, (vocab_size, hidden_dim), jnp.float32, -bound1, bound1)
    b1 = jax.random.uniform(k2, (hidden_dim,), jnp.float32, -bound1, bound1)
    w2 = jax.random.uniform(k3, (hidden_dim, output_dim), jnp.float32, -bound2, bound2)
    b2 = jax.random.uniform(k4, (output_dim,), jnp.float32, -bound2, bound2)
    return w1, b1, w2, b2


if __name__ == "__main__":
    # Small shapes consistent with the module: bag-of-words vectors -> hidden -> categories.
    BATCH = 8
    VOCAB_SIZE = 512
    HIDDEN_DIM = 256
    OUTPUT_DIM = 10

    key = jax.random.PRNGKey(0)
    k_x, k_p = jax.random.split(key)

    # Synthetic CountVectorizer-style input: non-negative integer counts, float32.
    x = jax.random.randint(k_x, (BATCH, VOCAB_SIZE), 0, 3).astype(jnp.float32)
    w1, b1, w2, b2 = init_params(k_p, VOCAB_SIZE, HIDDEN_DIM, OUTPUT_DIM)

    # One-time weight prep (hoisted out of the per-call path). block_k=256 so the vocab
    # reduction axis has >1 grid step and exercises the accumulator init/finalize logic.
    params = prepare_params(w1, b1, w2, b2, block_k=256)

    out = category_classifier_forward(x, params)
    out = jax.block_until_ready(out)

    # References:
    #  (a) quantized reference using the same bf16 rounding the kernel applies (tight check);
    #  (b) true f32 reference (loose check, measures real bf16-induced error).
    x_bf = x.astype(jnp.bfloat16).astype(jnp.float32)
    w1_bf = w1.astype(jnp.bfloat16).astype(jnp.float32)
    w2_bf = w2.astype(jnp.bfloat16).astype(jnp.float32)
    h_q = jnp.maximum(x_bf @ w1_bf + b1[None, :], 0.0)
    ref_q = h_q.astype(jnp.bfloat16).astype(jnp.float32) @ w2_bf + b2[None, :]
    ref_f32 = jnp.maximum(x @ w1 + b1[None, :], 0.0) @ w2 + b2[None, :]

    assert out.shape == (BATCH, OUTPUT_DIM)
    assert jnp.allclose(out, ref_q, atol=5e-3, rtol=5e-3), "mismatch vs bf16-quantized reference"
    assert jnp.allclose(out, ref_f32, atol=2e-2, rtol=2e-2), "mismatch vs true f32 reference"

    print("KERNEL_OK")
</pallas_src>

<mosaic_0001>
module attributes {stable_mosaic.version = 11 : i64} {
  func.func @_mlp_kernel(%arg0: i32, %arg1: i32, %arg2: memref<16x256xbf16, #tpu.memory_space<vmem>>, %arg3: memref<256x256xbf16, #tpu.memory_space<vmem>>, %arg4: memref<1x256xf32, #tpu.memory_space<vmem>>, %arg5: memref<256x128xbf16, #tpu.memory_space<vmem>>, %arg6: memref<1x128xf32, #tpu.memory_space<vmem>>, %arg7: memref<16x128xf32, #tpu.memory_space<vmem>>, %arg8: memref<16x256xf32, #tpu.memory_space<vmem>>) attributes {dimension_semantics = [#tpu.dimension_semantics<parallel>, #tpu.dimension_semantics<arbitrary>], iteration_bounds = array<i64: 1, 2>, scalar_prefetch = 0 : i64, scratch_operands = 1 : i64, tpu.core_type = #tpu.core_type<tc>, window_params = [{transform_indices = @transform_0, window_bounds = array<i64: 16, 256>}, {transform_indices = @transform_1, window_bounds = array<i64: 256, 256>}, {pipeline_mode = #tpu.pipeline_mode<synchronous>, transform_indices = @transform_2, window_bounds = array<i64: 1, 256>}, {pipeline_mode = #tpu.pipeline_mode<synchronous>, transform_indices = @transform_3, window_bounds = array<i64: 256, 128>}, {pipeline_mode = #tpu.pipeline_mode<synchronous>, transform_indices = @transform_4, window_bounds = array<i64: 1, 128>}, {transform_indices = @transform_5, window_bounds = array<i64: 16, 128>}]} {
    %c0_i32 = arith.constant 0 : i32
    %0 = arith.cmpi eq, %arg1, %c0_i32 : i32
    %1 = arith.extui %0 : i1 to i32
    %c0_i32_0 = arith.constant 0 : i32
    %2 = arith.cmpi ne, %1, %c0_i32_0 : i32
    scf.if %2 {
      %cst_9 = arith.constant 0.000000e+00 : f32
      %12 = vector.broadcast %cst_9 : f32 to vector<16x256xf32>
      %c0_10 = arith.constant 0 : index
      %c0_11 = arith.constant 0 : index
      %13 = vector.load %arg8[%c0_10, %c0_11] : memref<16x256xf32, #tpu.memory_space<vmem>>, vector<16x256xf32>
      tpu.vector_store %arg8[%c0_10, %c0_11], %12 {strides = array<i32>} : memref<16x256xf32, #tpu.memory_space<vmem>>, vector<16x256xf32>,
    } else {
    }
    %c0 = arith.constant 0 : index
    %c0_1 = arith.constant 0 : index
    %3 = vector.load %arg8[%c0, %c0_1] : memref<16x256xf32, #tpu.memory_space<vmem>>, vector<16x256xf32>
    %c0_2 = arith.constant 0 : index
    %c0_3 = arith.constant 0 : index
    %4 = vector.load %arg2[%c0_2, %c0_3] : memref<16x256xbf16, #tpu.memory_space<vmem>>, vector<16x256xbf16>
    %c0_4 = arith.constant 0 : index
    %c0_5 = arith.constant 0 : index
    %5 = vector.load %arg3[%c0_4, %c0_5] : memref<256x256xbf16, #tpu.memory_space<vmem>>, vector<256x256xbf16>
    %cst = arith.constant dense<0.000000e+00> : vector<16x256xf32>
    %6 = tpu.matmul %4, %5, %cst {dimension_numbers = #tpu.dot_dimension_numbers<[1], [0], [0], [1], [0, 0, 1, 1], [], []>} : vector<16x256xbf16>, vector<256x256xbf16>, vector<16x256xf32> -> vector<16x256xf32>
    %7 = arith.addf %3, %6 : vector<16x256xf32>
    %c0_6 = arith.constant 0 : index
    %c0_7 = arith.constant 0 : index
    %8 = vector.load %arg8[%c0_6, %c0_7] : memref<16x256xf32, #tpu.memory_space<vmem>>, vector<16x256xf32>
    tpu.vector_store %arg8[%c0_6, %c0_7], %7 {strides = array<i32>} : memref<16x256xf32, #tpu.memory_space<vmem>>, vector<16x256xf32>,
    %c1_i32 = arith.constant 1 : i32
    %9 = arith.cmpi eq, %arg1, %c1_i32 : i32
    %10 = arith.extui %9 : i1 to i32
    %c0_i32_8 = arith.constant 0 : i32
    %11 = arith.cmpi ne, %10, %c0_i32_8 : i32
    scf.if %11 {
      %c0_9 = arith.constant 0 : index
      %c0_10 = arith.constant 0 : index
      %12 = vector.load %arg8[%c0_9, %c0_10] : memref<16x256xf32, #tpu.memory_space<vmem>>, vector<16x256xf32>
      %c0_11 = arith.constant 0 : index
      %c0_12 = arith.constant 0 : index
      %13 = vector.load %arg4[%c0_11, %c0_12] : memref<1x256xf32, #tpu.memory_space<vmem>>, vector<1x256xf32>
      %14 = vector.broadcast %13 : vector<1x256xf32> to vector<16x256xf32>
      %15 = arith.addf %12, %14 : vector<16x256xf32>
      %cst_13 = arith.constant 0.000000e+00 : f32
      %16 = vector.broadcast %cst_13 : f32 to vector<16x256xf32>
      %17 = arith.maximumf %15, %16 : vector<16x256xf32>
      %18 = arith.truncf %17 : vector<16x256xf32> to vector<16x256xbf16>
      %c0_14 = arith.constant 0 : index
      %c0_15 = arith.constant 0 : index
      %19 = vector.load %arg5[%c0_14, %c0_15] : memref<256x128xbf16, #tpu.memory_space<vmem>>, vector<256x128xbf16>
      %cst_16 = arith.constant dense<0.000000e+00> : vector<16x128xf32>
      %20 = tpu.matmul %18, %19, %cst_16 {dimension_numbers = #tpu.dot_dimension_numbers<[1], [0], [0], [1], [0, 0, 1, 1], [], []>} : vector<16x256xbf16>, vector<256x128xbf16>, vector<16x128xf32> -> vector<16x128xf32>
      %c0_17 = arith.constant 0 : index
      %c0_18 = arith.constant 0 : index
      %21 = vector.load %arg6[%c0_17, %c0_18] : memref<1x128xf32, #tpu.memory_space<vmem>>, vector<1x128xf32>
      %22 = vector.broadcast %21 : vector<1x128xf32> to vector<16x128xf32>
      %23 = arith.addf %20, %22 : vector<16x128xf32>
      %c0_19 = arith.constant 0 : index
      %c0_20 = arith.constant 0 : index
      %24 = vector.load %arg7[%c0_19, %c0_20] : memref<16x128xf32, #tpu.memory_space<vmem>>, vector<16x128xf32>
      tpu.vector_store %arg7[%c0_19, %c0_20], %23 {strides = array<i32>} : memref<16x128xf32, #tpu.memory_space<vmem>>, vector<16x128xf32>,
    } else {
    }
    return
  }
  func.func @transform_0(%arg0: i32, %arg1: i32) -> (i32, i32) {
    %c0_i32 = arith.constant 0 : i32
    return %arg0, %arg1 : i32, i32
  }
  func.func @transform_1(%arg0: i32, %arg1: i32) -> (i32, i32) {
    %c0_i32 = arith.constant 0 : i32
    %c0_i32_0 = arith.constant 0 : i32
    return %arg1, %c0_i32 : i32, i32
  }
  func.func @transform_2(%arg0: i32, %arg1: i32) -> (i32, i32) {
    %c0_i32 = arith.constant 0 : i32
    %c0_i32_0 = arith.constant 0 : i32
    %c0_i32_1 = arith.constant 0 : i32
    return %c0_i32, %c0_i32_0 : i32, i32
  }
  func.func @transform_3(%arg0: i32, %arg1: i32) -> (i32, i32) {
    %c0_i32 = arith.constant 0 : i32
    %c0_i32_0 = arith.constant 0 : i32
    %c0_i32_1 = arith.constant 0 : i32
    return %c0_i32, %c0_i32_0 : i32, i32
  }
  func.func @transform_4(%arg0: i32, %arg1: i32) -> (i32, i32) {
    %c0_i32 = arith.constant 0 : i32
    %c0_i32_0 = arith.constant 0 : i32
    %c0_i32_1 = arith.constant 0 : i32
    return %c0_i32, %c0_i32_0 : i32, i32
  }
  func.func @transform_5(%arg0: i32, %arg1: i32) -> (i32, i32) {
    %c0_i32 = arith.constant 0 : i32
    %c0_i32_0 = arith.constant 0 : i32
    return %arg0, %c0_i32 : i32, i32
  }
}

</mosaic_0001>

<llo_original>
// kernel: tpu_custom_call.1
$region0: #{tpu_custom_call.1}
  #allocation0 [shape = 'u32[]', space=smem, size = 0x4, offset = 0x4, fixed_abs, tag = 'smem constant byte address 0x4 - core index']
  #allocation1 [shape = 'u32[144,128]{1,0:T(1,128)}', space=vmem, size = 0x12000, scoped, tag = 'internal scratch']
  #allocation2 [shape = 'f32[16,256]{1,0:T(8,128)}', space=vmem, size = 0x4000, scoped, tag = 'scratch operand']
  %s0 = inlined_call_operand.hbm [shape: bf16[16,512], index: 0, kind: input, shape index: {}]
  %s1 = inlined_call_operand.hbm [shape: bf16[512,256], index: 1, kind: input, shape index: {}]
  %s2 = inlined_call_operand.vmem [shape: f32[1,256], index: 2, kind: input, shape index: {}]
  %s3 = inlined_call_operand.hbm [shape: bf16[256,128], index: 3, kind: input, shape index: {}]
  %s4 = inlined_call_operand.vmem [shape: f32[1,128], index: 4, kind: input, shape index: {}]
  %s5 = inlined_call_operand.hbm [shape: f32[16,128], index: 5, kind: output, shape index: {}]
  %s6 = sld [smem:[#allocation0]]
  $region73: #{tpu_custom_call.1} parent=0
    _
  %s8 = ssub.s32 1, %s6
  %s9 = scalar_select 0, %s8, %s6
  $region1: #{tpu_custom_call.1} parent=0
    #allocation3 [shape = 'u8[16384]{0}', space=vmem, size = 0x4000, scoped, tag = 'input window, operand 0']
    #allocation4 [shape = 's32[2]{0}', space=sflag, size = 0x8, scoped, tag = 'scoped memory for tpu_custom_call.1']
    #allocation5 [shape = 's32[2]{0}', space=sflag, size = 0x8, scoped, tag = 'scoped memory for tpu_custom_call.1']
    #allocation6 [shape = 'u8[262144]{0}', space=vmem, size = 0x40000, scoped, tag = 'input window, operand 1']
    #allocation7 [shape = 's32[2]{0}', space=sflag, size = 0x8, scoped, tag = 'scoped memory for tpu_custom_call.1']
    #allocation8 [shape = 'u8[65536]{0}', space=vmem, size = 0x10000, scoped, tag = 'input window, operand 3, single buffered']
    #allocation9 [shape = 'u8[8192]{0}', space=vmem, size = 0x2000, scoped, tag = 'output window, operand 0, single buffered']
    %10 = vsyncpa [#allocation4], 0
    %s11 = scalar_lea.sflag [#allocation4], 1
    %12 = vsyncpa %s11, 0
    %13 = vsyncpa [#allocation7], 0
    %s14 = scalar_lea.sflag [#allocation7], 1
    %15 = vsyncpa %s14, 0
    %16 = vsyncpa [#allocation5], 0
    loop: start=0, step=1, limit=4
    $region2: #{tpu_custom_call.1} parent=1 // loop_pre_header
      _
    $region3: #{tpu_custom_call.1} parent=1 // loop_header
      %s18 = sphi 0, %s22
      %p19 = scmp.ge.s32.totalorder %s18, 4
      %s25 = sphi 0, %s37
      %s26 = sphi 0, %s33
      %s27 = sphi 0, %s25
      %s28 = sphi 0, %s26
      %s29 = sphi 0, %s27
      %s30 = sphi 0, %s28
      %s42 = sphi 0, %s44
      %s45 = sphi 0, %s42
      %s46 = sphi 0, %s45
      %s62 = sphi 0, %s46
      %s68 = sphi 0, %s70
      %s71 = sphi 0, %s68
      %s72 = sphi 0, %s71
      %s88 = sphi 0, %s72
      %s92 = sphi 0, %s92
      %s94 = sphi 0, %s92
      %s95 = sphi 0, %s94
      %s109 = sphi 0, %s95
      %s113 = sphi 0, %s113
      %s115 = sphi 0, %s113
      %s116 = sphi 0, %s115
      %s130 = sphi 0, %s116
      %s134 = sphi 0, %s134
      %s136 = sphi 0, %s134
      %s137 = sphi 0, %s136
      %s151 = sphi 0, %s137
      %s157 = sphi 0, %s159
      %s160 = sphi 0, %s157
      %s161 = sphi 0, %s160
      %s177 = sphi 0, %s161
    $region4: #{tpu_custom_call.1} parent=1 // loop_header_branch
      %21 = sbr.rel (%p19) target = $region8
    $region5: #{tpu_custom_call.1} parent=1 // loop_body
      %s23 = ssub.s32 %s18, 1
      %s24 = ssub.s32 %s18, 2
      %s31 = sadd.s32 1, %s26
      %p32 = scmp.ge.s32.totalorder %s31, 2
      %s33 = scalar_select %p32, 0, %s31
      %s34 = sadd.s32 1, %s25
      %s35 = scalar_select %p32, %s34, %s25
      %p36 = scmp.ge.s32.totalorder %s35, 1
      %s37 = scalar_select %p36, 0, %s35
      %s38 = ssub.s32 %s25, %s37
      %s39 = ssub.s32 %s26, %s33
      %s40 = sor.u32 %s38, %s39
      %p41 = scmp.eq.s32.totalorder %s40, 0
      %s43 = sadd.s32 %s42, 1
      %s44 = scalar_select %p41, %s42, %s43
      %p47 = pneg %p41
      %p48 = scmp.eq.s32.totalorder %s18, 1
      %p49 = por %p47, %p48
      %p50 = scmp.ne.s32.totalorder %s42, %s45
      %p51 = scmp.eq.s32.totalorder %s18, 0
      %p52 = por %p50, %p51
      %p53 = scmp.ne.s32.totalorder %s42, %s45
      %p54 = scmp.eq.s32.totalorder %s23, 1
      %p55 = por %p53, %p54
      %p56 = scmp.ne.s32.totalorder %s45, %s46
      %p57 = scmp.eq.s32.totalorder %s23, 0
      %p58 = por %p56, %p57
      %p59 = scmp.ne.s32.totalorder %s45, %s46
      %p60 = scmp.eq.s32.totalorder %s24, 1
      %p61 = por %p59, %p60
      %p63 = scmp.ne.s32.totalorder %s46, %s62
      %p64 = scmp.eq.s32.totalorder %s24, 0
      %p65 = por %p63, %p64
      %s66 = ssub.s32 %s26, %s33
      %p67 = scmp.eq.s32.totalorder %s66, 0
      %s69 = sadd.s32 %s68, 1
      %s70 = scalar_select %p67, %s68, %s69
      %p73 = pneg %p67
      %p74 = scmp.eq.s32.totalorder %s18, 1
      %p75 = por %p73, %p74
      %p76 = scmp.ne.s32.totalorder %s68, %s71
      %p77 = scmp.eq.s32.totalorder %s18, 0
      %p78 = por %p76, %p77
      %p79 = scmp.ne.s32.totalorder %s68, %s71
      %p80 = scmp.eq.s32.totalorder %s23, 1
      %p81 = por %p79, %p80
      %p82 = scmp.ne.s32.totalorder %s71, %s72
      %p83 = scmp.eq.s32.totalorder %s23, 0
      %p84 = por %p82, %p83
      %p85 = scmp.ne.s32.totalorder %s71, %s72
      %p86 = scmp.eq.s32.totalorder %s24, 1
      %p87 = por %p85, %p86
      %p89 = scmp.ne.s32.totalorder %s72, %s88
      %p90 = scmp.eq.s32.totalorder %s24, 0
      %p91 = por %p89, %p90
      %s93 = sadd.s32 %s92, 1
      %p96 = scmp.eq.s32.totalorder %s18, 1
      %p97 = scmp.ne.s32.totalorder %s92, %s94
      %p98 = scmp.eq.s32.totalorder %s18, 0
      %p99 = por %p97, %p98
      %p100 = scmp.ne.s32.totalorder %s92, %s94
      %p101 = scmp.eq.s32.totalorder %s23, 1
      %p102 = por %p100, %p101
      %p103 = scmp.ne.s32.totalorder %s94, %s95
      %p104 = scmp.eq.s32.totalorder %s23, 0
      %p105 = por %p103, %p104
      %p106 = scmp.ne.s32.totalorder %s94, %s95
      %p107 = scmp.eq.s32.totalorder %s24, 1
      %p108 = por %p106, %p107
      %p110 = scmp.ne.s32.totalorder %s95, %s109
      %p111 = scmp.eq.s32.totalorder %s24, 0
      %p112 = por %p110, %p111
      %s114 = sadd.s32 %s113, 1
      %p117 = scmp.eq.s32.totalorder %s18, 1
      %p118 = scmp.ne.s32.totalorder %s113, %s115
      %p119 = scmp.eq.s32.totalorder %s18, 0
      %p120 = por %p118, %p119
      %p121 = scmp.ne.s32.totalorder %s113, %s115
      %p122 = scmp.eq.s32.totalorder %s23, 1
      %p123 = por %p121, %p122
      %p124 = scmp.ne.s32.totalorder %s115, %s116
      %p125 = scmp.eq.s32.totalorder %s23, 0
      %p126 = por %p124, %p125
      %p127 = scmp.ne.s32.totalorder %s115, %s116
      %p128 = scmp.eq.s32.totalorder %s24, 1
      %p129 = por %p127, %p128
      %p131 = scmp.ne.s32.totalorder %s116, %s130
      %p132 = scmp.eq.s32.totalorder %s24, 0
      %p133 = por %p131, %p132
      %s135 = sadd.s32 %s134, 1
      %p138 = scmp.eq.s32.totalorder %s18, 1
      %p139 = scmp.ne.s32.totalorder %s134, %s136
      %p140 = scmp.eq.s32.totalorder %s18, 0
      %p141 = por %p139, %p140
      %p142 = scmp.ne.s32.totalorder %s134, %s136
      %p143 = scmp.eq.s32.totalorder %s23, 1
      %p144 = por %p142, %p143
      %p145 = scmp.ne.s32.totalorder %s136, %s137
      %p146 = scmp.eq.s32.totalorder %s23, 0
      %p147 = por %p145, %p146
      %p148 = scmp.ne.s32.totalorder %s136, %s137
      %p149 = scmp.eq.s32.totalorder %s24, 1
      %p150 = por %p148, %p149
      %p152 = scmp.ne.s32.totalorder %s137, %s151
      %p153 = scmp.eq.s32.totalorder %s24, 0
      %p154 = por %p152, %p153
      %s155 = ssub.s32 %s25, %s37
      %p156 = scmp.eq.s32.totalorder %s155, 0
      %s158 = sadd.s32 %s157, 1
      %s159 = scalar_select %p156, %s157, %s158
      %p162 = pneg %p156
      %p163 = scmp.eq.s32.totalorder %s18, 1
      %p164 = por %p162, %p163
      %p165 = scmp.ne.s32.totalorder %s157, %s160
      %p166 = scmp.eq.s32.totalorder %s18, 0
      %p167 = por %p165, %p166
      %p168 = scmp.ne.s32.totalorder %s157, %s160
      %p169 = scmp.eq.s32.totalorder %s23, 1
      %p170 = por %p168, %p169
      %p171 = scmp.ne.s32.totalorder %s160, %s161
      %p172 = scmp.eq.s32.totalorder %s23, 0
      %p173 = por %p171, %p172
      %p174 = scmp.ne.s32.totalorder %s160, %s161
      %p175 = scmp.eq.s32.totalorder %s24, 1
      %p176 = por %p174, %p175
      %p178 = scmp.ne.s32.totalorder %s161, %s177
      %p179 = scmp.eq.s32.totalorder %s24, 0
      %p180 = por %p178, %p179
      %p181 = scmp.le.s32.totalorder 1, %s18
      %p182 = scmp.lt.s32.totalorder %s18, 3
      %p183 = pnand %p181, %p182
      %p184 = pneg %p183
      // Predicated region
      $region9: #{tpu_custom_call.1} parent=5 // pred_check
        _
      $region10: #{tpu_custom_call.1} parent=5 // pred_check_branch
        %186 = sbr.rel (%p183) target = $region12
      $region11: #{tpu_custom_call.1} parent=5 // pred_region
        %s187 = ssub.s32 %s18, 1
        // Predicated region
        $region13: #{tpu_custom_call.1} parent=11 // pred_check
          %p188 = pneg %p105
        $region14: #{tpu_custom_call.1} parent=11 // pred_check_branch
          %190 = sbr.rel (%p188) target = $region16
        $region15: #{tpu_custom_call.1} parent=11 // pred_region
          _
        $region16: #{tpu_custom_call.1} parent=11 // pred_fallthru
          _
        // Predicated region
        $region17: #{tpu_custom_call.1} parent=11 // pred_check
          %p191 = pneg %p126
        $region18: #{tpu_custom_call.1} parent=11 // pred_check_branch
          %193 = sbr.rel (%p191) target = $region20
        $region19: #{tpu_custom_call.1} parent=11 // pred_region
          %s195 = ssub.s32 2048, 2048
          %196 = vsyncadd [#allocation7], %s195
          %s197 = sshll.u32 [#allocation8], 4
          %s198 = int_to_ptr.vmem [resolvable:$true] %s197
          %203 = dma.hbm_to_vmem [thread:$0]  %s3, 2048, %s198, [#allocation7], 64, 64, 4
        $region20: #{tpu_custom_call.1} parent=11 // pred_fallthru
          _
        // Predicated region
        $region21: #{tpu_custom_call.1} parent=11 // pred_check
          %p204 = pneg %p147
        $region22: #{tpu_custom_call.1} parent=11 // pred_check_branch
          %206 = sbr.rel (%p204) target = $region24
        $region23: #{tpu_custom_call.1} parent=11 // pred_region
          _
        $region24: #{tpu_custom_call.1} parent=11 // pred_fallthru
          _
      $region12: #{tpu_custom_call.1} parent=5 // pred_fallthru
        _
      %p207 = scmp.lt.s32.totalorder %s18, 2
      // Predicated region
      $region25: #{tpu_custom_call.1} parent=5 // pred_check
        %p208 = pneg %p207
      $region26: #{tpu_custom_call.1} parent=5 // pred_check_branch
        %210 = sbr.rel (%p208) target = $region28
      $region27: #{tpu_custom_call.1} parent=5 // pred_region
        // Predicated region
        $region29: #{tpu_custom_call.1} parent=27 // pred_check
          %p211 = pneg %p52
        $region30: #{tpu_custom_call.1} parent=27 // pred_check_branch
          %213 = sbr.rel (%p211) target = $region32
        $region31: #{tpu_custom_call.1} parent=27 // pred_region
          %s214 = sand.u32 %s42, 1
          %s215 = scalar_lea.sflag [#allocation4], %s214
          %s216 = sand.u32 %s42, 1
          %s217 = smul.addr %s216, 16
          %s218 = scalar_lea.vmem [#allocation3], %s217
          %s219 = smul.u32 2, %s25
          %s220 = smul.u32 2, %s26
          %s222 = ssub.s32 256, 256
          %223 = vsyncadd %s215, %s222
          %s224 = smul.addr %s219, 4
          %s225 = sadd.s32 %s220, %s224
          %s226 = smul.addr %s225, 64
          %s227 = scalar_lea.hbm %s0, %s226
          %s228 = sshll.u32 %s218, 4
          %s229 = int_to_ptr.vmem [resolvable:$true] %s228
          %234 = dma.hbm_to_vmem [thread:$0]  %s227, 256, %s229, %s215, 256, 128, 8
        $region32: #{tpu_custom_call.1} parent=27 // pred_fallthru
          _
        // Predicated region
        $region33: #{tpu_custom_call.1} parent=27 // pred_check
          %p235 = pneg %p78
        $region34: #{tpu_custom_call.1} parent=27 // pred_check_branch
          %237 = sbr.rel (%p235) target = $region36
        $region35: #{tpu_custom_call.1} parent=27 // pred_region
          %s238 = sand.u32 %s18, 1
          %s239 = scalar_lea.sflag [#allocation7], %s238
          %s240 = sand.u32 %s68, 1
          %s241 = smul.addr %s240, 256
          %s242 = scalar_lea.vmem [#allocation6], %s241
          %s243 = smul.u32 32, %s26
          %s245 = ssub.s32 4096, 4096
          %246 = vsyncadd %s239, %s245
          %s247 = smul.addr %s243, 2
          %s248 = smul.addr %s247, 64
          %s249 = scalar_lea.hbm %s1, %s248
          %s250 = sshll.u32 %s242, 4
          %s251 = int_to_ptr.vmem [resolvable:$true] %s250
          %256 = dma.hbm_to_vmem [thread:$0]  %s249, 4096, %s251, %s239, 128, 128, 8
        $region36: #{tpu_custom_call.1} parent=27 // pred_fallthru
          _
      $region28: #{tpu_custom_call.1} parent=5 // pred_fallthru
        _
      %p257 = scmp.le.s32.totalorder 1, %s18
      %p258 = scmp.lt.s32.totalorder %s18, 3
      %p259 = pnand %p257, %p258
      %p260 = pneg %p259
      // Predicated region
      $region37: #{tpu_custom_call.1} parent=5 // pred_check
        _
      $region38: #{tpu_custom_call.1} parent=5 // pred_check_branch
        %262 = sbr.rel (%p259) target = $region40
      $region39: #{tpu_custom_call.1} parent=5 // pred_region
        %s263 = ssub.s32 %s18, 1
        %s264 = sand.u32 %s45, 1
        %s265 = scalar_lea.sflag [#allocation4], %s264
        %s266 = sand.u32 %s45, 1
        %s267 = smul.addr %s266, 16
        %s268 = scalar_lea.vmem [#allocation3], %s267
        // Predicated region
        $region41: #{tpu_custom_call.1} parent=39 // pred_check
          %p269 = pneg %p58
        $region42: #{tpu_custom_call.1} parent=39 // pred_check_branch
          %271 = sbr.rel (%p269) target = $region44
        $region43: #{tpu_custom_call.1} parent=39 // pred_region
          %272 = dma.done %s265, 256
        $region44: #{tpu_custom_call.1} parent=39 // pred_fallthru
          _
        %s273 = sand.u32 %s23, 1
        %s274 = scalar_lea.sflag [#allocation7], %s273
        %s275 = sand.u32 %s71, 1
        %s276 = smul.addr %s275, 256
        %s277 = scalar_lea.vmem [#allocation6], %s276
        // Predicated region
        $region45: #{tpu_custom_call.1} parent=39 // pred_check
          %p278 = pneg %p84
        $region46: #{tpu_custom_call.1} parent=39 // pred_check_branch
          %280 = sbr.rel (%p278) target = $region48
        $region47: #{tpu_custom_call.1} parent=39 // pred_region
          %281 = dma.done %s274, 4096
        $region48: #{tpu_custom_call.1} parent=39 // pred_fallthru
          _
        // Predicated region
        $region49: #{tpu_custom_call.1} parent=39 // pred_check
          %p282 = pneg %p126
        $region50: #{tpu_custom_call.1} parent=39 // pred_check_branch
          %284 = sbr.rel (%p282) target = $region52
        $region51: #{tpu_custom_call.1} parent=39 // pred_region
          %285 = dma.done [#allocation7], 2048
        $region52: #{tpu_custom_call.1} parent=39 // pred_fallthru
          _
        %s286 = sand.u32 %s45, 1
        %s287 = scalar_lea.sflag [#allocation4], %s286
        %s288 = sand.u32 %s45, 1
        %s289 = smul.addr %s288, 16
        %s290 = scalar_lea.vmem [#allocation3], %s289
        %p291 = pneg %p58
        %p292 = pneg %p55
        %s293 = sand.u32 %s23, 1
        %s294 = scalar_lea.sflag [#allocation7], %s293
        %s295 = sand.u32 %s71, 1
        %s296 = smul.addr %s295, 256
        %s297 = scalar_lea.vmem [#allocation6], %s296
        %p298 = pneg %p84
        %p299 = pneg %p81
        %p300 = pneg %p105
        %p301 = pneg %p102
        %p302 = pneg %p126
        %p303 = pneg %p123
        %p304 = pneg %p147
        %p305 = pneg %p144
        %p306 = pneg %p173
        %p307 = pneg %p170
        %s308 = smul.u32 2, %s27
        %s309 = smul.u32 2, %s28
        %s310 = smul.u32 32, %s28
        %s311 = smul.u32 2, %s27
        %p313 = scmp.eq.s32.totalorder %s28, 0
        // Predicated region
        $region53: #{tpu_custom_call.1} parent=39 // pred_check
          %p314 = pneg %p313
        $region54: #{tpu_custom_call.1} parent=39 // pred_check_branch
          %316 = sbr.rel (%p314) target = $region56
        $region55: #{tpu_custom_call.1} parent=39 // pred_region
          %317 = vst [vmem:[#allocation2] sm:$0xff] 0.0
          %318 = vst [vmem:[#allocation2 + $0x8] sm:$0xff] 0.0
          %319 = vst [vmem:[#allocation2 + $0x10] sm:$0xff] 0.0
          %320 = vst [vmem:[#allocation2 + $0x18] sm:$0xff] 0.0
        $region56: #{tpu_custom_call.1} parent=39 // pred_fallthru
          _
        %v321 = vld [vmem:[#allocation2] sm:$0xff]
        %v322 = vld [vmem:[#allocation2 + $0x8] sm:$0xff]
        %v323 = vld [vmem:[#allocation2 + $0x10] sm:$0xff]
        %v324 = vld [vmem:[#allocation2 + $0x18] sm:$0xff]
        %v325 = vld [vmem:[%s268] sm:$0xff]
        %v326 = vld [vmem:[%s268 + $0x8] sm:$0xff]
        %v327 = vld [vmem:[%s277] sm:$0xff]
        %v328 = vld [vmem:[%s277 + $0x8] sm:$0xff]
        %v329 = vld [vmem:[%s277 + $0x10] sm:$0xff]
        %v330 = vld [vmem:[%s277 + $0x18] sm:$0xff]
        %v331 = vld [vmem:[%s277 + $0x20] sm:$0xff]
        %v332 = vld [vmem:[%s277 + $0x28] sm:$0xff]
        %v333 = vld [vmem:[%s277 + $0x30] sm:$0xff]
        %v334 = vld [vmem:[%s277 + $0x38] sm:$0xff]
        %v335 = vld [vmem:[%s277 + $0x40] sm:$0xff]
        %v336 = vld [vmem:[%s277 + $0x48] sm:$0xff]
        %v337 = vld [vmem:[%s277 + $0x50] sm:$0xff]
        %v338 = vld [vmem:[%s277 + $0x58] sm:$0xff]
        %v339 = vld [vmem:[%s277 + $0x60] sm:$0xff]
        %v340 = vld [vmem:[%s277 + $0x68] sm:$0xff]
        %v341 = vld [vmem:[%s277 + $0x70] sm:$0xff]
        %v342 = vld [vmem:[%s277 + $0x78] sm:$0xff]
        %v343 = vld [vmem:[%s277 + $0x80] sm:$0xff]
        %v344 = vld [vmem:[%s277 + $0x88] sm:$0xff]
        %v345 = vld [vmem:[%s277 + $0x90] sm:$0xff]
        %v346 = vld [vmem:[%s277 + $0x98] sm:$0xff]
        %v347 = vld [vmem:[%s277 + $0xa0] sm:$0xff]
        %v348 = vld [vmem:[%s277 + $0xa8] sm:$0xff]
        %v349 = vld [vmem:[%s277 + $0xb0] sm:$0xff]
        %v350 = vld [vmem:[%s277 + $0xb8] sm:$0xff]
        %v351 = vld [vmem:[%s277 + $0xc0] sm:$0xff]
        %v352 = vld [vmem:[%s277 + $0xc8] sm:$0xff]
        %v353 = vld [vmem:[%s277 + $0xd0] sm:$0xff]
        %v354 = vld [vmem:[%s277 + $0xd8] sm:$0xff]
        %v355 = vld [vmem:[%s277 + $0xe0] sm:$0xff]
        %v356 = vld [vmem:[%s277 + $0xe8] sm:$0xff]
        %v357 = vld [vmem:[%s277 + $0xf0] sm:$0xff]
        %v358 = vld [vmem:[%s277 + $0xf8] sm:$0xff]
        %v361 = vunpack.c.l.b16 %v325
        %v362 = vunpack.c.h.b16 %v325
        %v363 = vunpack.c.l.b16 %v326
        %v364 = vunpack.c.h.b16 %v326
        %v365 = vpack.c.b16 %v363, %v361
        %v366 = vpack.c.b16 %v364, %v362
        %v401 = vunpack.c.l.b16 %v327
        %v402 = vunpack.c.h.b16 %v327
        %v403 = vunpack.c.l.b16 %v328
        %v404 = vunpack.c.h.b16 %v328
        %v405 = vunpack.c.l.b16 %v329
        %v406 = vunpack.c.h.b16 %v329
        %v407 = vunpack.c.l.b16 %v330
        %v408 = vunpack.c.h.b16 %v330
        %v409 = vunpack.c.l.b16 %v331
        %v410 = vunpack.c.h.b16 %v331
        %v411 = vunpack.c.l.b16 %v332
        %v412 = vunpack.c.h.b16 %v332
        %v413 = vunpack.c.l.b16 %v333
        %v414 = vunpack.c.h.b16 %v333
        %v415 = vunpack.c.l.b16 %v334
        %v416 = vunpack.c.h.b16 %v334
        %v417 = vunpack.c.l.b16 %v335
        %v418 = vunpack.c.h.b16 %v335
        %v419 = vunpack.c.l.b16 %v336
        %v420 = vunpack.c.h.b16 %v336
        %v421 = vunpack.c.l.b16 %v337
        %v422 = vunpack.c.h.b16 %v337
        %v423 = vunpack.c.l.b16 %v338
        %v424 = vunpack.c.h.b16 %v338
        %v425 = vunpack.c.l.b16 %v339
        %v426 = vunpack.c.h.b16 %v339
        %v427 = vunpack.c.l.b16 %v340
        %v428 = vunpack.c.h.b16 %v340
        %v429 = vunpack.c.l.b16 %v341
        %v430 = vunpack.c.h.b16 %v341
        %v431 = vunpack.c.l.b16 %v342
        %v432 = vunpack.c.h.b16 %v342
        %v433 = vunpack.c.l.b16 %v343
        %v434 = vunpack.c.h.b16 %v343
        %v435 = vunpack.c.l.b16 %v344
        %v436 = vunpack.c.h.b16 %v344
        %v437 = vunpack.c.l.b16 %v345
        %v438 = vunpack.c.h.b16 %v345
        %v439 = vunpack.c.l.b16 %v346
        %v440 = vunpack.c.h.b16 %v346
        %v441 = vunpack.c.l.b16 %v347
        %v442 = vunpack.c.h.b16 %v347
        %v443 = vunpack.c.l.b16 %v348
        %v444 = vunpack.c.h.b16 %v348
        %v445 = vunpack.c.l.b16 %v349
        %v446 = vunpack.c.h.b16 %v349
        %v447 = vunpack.c.l.b16 %v350
        %v448 = vunpack.c.h.b16 %v350
        %v449 = vunpack.c.l.b16 %v351
        %v450 = vunpack.c.h.b16 %v351
        %v451 = vunpack.c.l.b16 %v352
        %v452 = vunpack.c.h.b16 %v352
        %v453 = vunpack.c.l.b16 %v353
        %v454 = vunpack.c.h.b16 %v353
        %v455 = vunpack.c.l.b16 %v354
        %v456 = vunpack.c.h.b16 %v354
        %v457 = vunpack.c.l.b16 %v355
        %v458 = vunpack.c.h.b16 %v355
        %v459 = vunpack.c.l.b16 %v356
        %v460 = vunpack.c.h.b16 %v356
        %v461 = vunpack.c.l.b16 %v357
        %v462 = vunpack.c.h.b16 %v357
        %v463 = vunpack.c.l.b16 %v358
        %v464 = vunpack.c.h.b16 %v358
        %v465 = vpack.c.b16 %v403, %v401
        %v466 = vpack.c.b16 %v404, %v402
        %v467 = vpack.c.b16 %v407, %v405
        %v468 = vpack.c.b16 %v408, %v406
        %v469 = vpack.c.b16 %v411, %v409
        %v470 = vpack.c.b16 %v412, %v410
        %v471 = vpack.c.b16 %v415, %v413
        %v472 = vpack.c.b16 %v416, %v414
        %v473 = vpack.c.b16 %v419, %v417
        %v474 = vpack.c.b16 %v420, %v418
        %v475 = vpack.c.b16 %v423, %v421
        %v476 = vpack.c.b16 %v424, %v422
        %v477 = vpack.c.b16 %v427, %v425
        %v478 = vpack.c.b16 %v428, %v426
        %v479 = vpack.c.b16 %v431, %v429
        %v480 = vpack.c.b16 %v432, %v430
        %v481 = vpack.c.b16 %v435, %v433
        %v482 = vpack.c.b16 %v436, %v434
        %v483 = vpack.c.b16 %v439, %v437
        %v484 = vpack.c.b16 %v440, %v438
        %v485 = vpack.c.b16 %v443, %v441
        %v486 = vpack.c.b16 %v444, %v442
        %v487 = vpack.c.b16 %v447, %v445
        %v488 = vpack.c.b16 %v448, %v446
        %v489 = vpack.c.b16 %v451, %v449
        %v490 = vpack.c.b16 %v452, %v450
        %v491 = vpack.c.b16 %v455, %v453
        %v492 = vpack.c.b16 %v456, %v454
        %v493 = vpack.c.b16 %v459, %v457
        %v494 = vpack.c.b16 %v460, %v458
        %v495 = vpack.c.b16 %v463, %v461
        %v496 = vpack.c.b16 %v464, %v462
        %529 = vmatprep.subr.bf16.mxu0 %v466
        %530 = vmatpush1.bf16.msra.mxu0 %v465
        %531 = vmatprep.subr.bf16.mxu0 %v468
        %532 = vmatpush1.bf16.msra.mxu0 %v467
        %533 = vmatprep.subr.bf16.mxu0 %v470
        %534 = vmatpush1.bf16.msra.mxu0 %v469
        %535 = vmatprep.subr.bf16.mxu0 %v472
        %536 = vmatpush1.bf16.msra.mxu0 %v471
        %537 = vmatprep.subr.bf16.mxu0 %v474
        %538 = vmatpush1.bf16.msra.mxu0 %v473
        %539 = vmatprep.subr.bf16.mxu0 %v476
        %540 = vmatpush1.bf16.msra.mxu0 %v475
        %541 = vmatprep.subr.bf16.mxu0 %v478
        %542 = vmatpush1.bf16.msra.mxu0 %v477
        %543 = vmatprep.subr.bf16.mxu0 %v480
        %544 = vmatpush1.bf16.msra.mxu0 %v479
        %545 = vmatprep.subr.bf16.mxu0 %v482
        %546 = vmatpush1.bf16.msra.mxu0 %v481
        %547 = vmatprep.subr.bf16.mxu0 %v484
        %548 = vmatpush1.bf16.msra.mxu0 %v483
        %549 = vmatprep.subr.bf16.mxu0 %v486
        %550 = vmatpush1.bf16.msra.mxu0 %v485
        %551 = vmatprep.subr.bf16.mxu0 %v488
        %552 = vmatpush1.bf16.msra.mxu0 %v487
        %553 = vmatprep.subr.bf16.mxu0 %v490
        %554 = vmatpush1.bf16.msra.mxu0 %v489
        %555 = vmatprep.subr.bf16.mxu0 %v492
        %556 = vmatpush1.bf16.msra.mxu0 %v491
        %557 = vmatprep.subr.bf16.mxu0 %v494
        %558 = vmatpush1.bf16.msra.mxu0 %v493
        %559 = vmatprep.subr.bf16.mxu0 %v496
        %560 = vmatpush1.bf16.msra.mxu0 %v495
        %561 = vmatprep.mubr.bf16.mxu0 %v366
        %562 = vmatmul.mubr.bf16.gmra.mrb[0].mxu0 %v365
        %v563 = vpop.f32.mrb[0].mxu0
        %v564 = vadd.f32 0.0, %v563
        %v565 = vpop.f32.mrb[0].mxu0
        %v566 = vadd.f32 0.0, %v565
        %v567 = vpop.f32.mrb[0].mxu0
        %v568 = vadd.f32 0.0, %v567
        %v569 = vpop.f32.mrb[0].mxu0
        %v570 = vadd.f32 0.0, %v569
        %571 = vdwg.mxu0
        %v572 = vadd.f32 %v321, %v564
        %v573 = vadd.f32 %v322, %v566
        %v574 = vadd.f32 %v323, %v568
        %v575 = vadd.f32 %v324, %v570
        %576 = vst [vmem:[#allocation2] sm:$0xff] %v572
        %577 = vst [vmem:[#allocation2 + $0x8] sm:$0xff] %v573
        %578 = vst [vmem:[#allocation2 + $0x10] sm:$0xff] %v574
        %579 = vst [vmem:[#allocation2 + $0x18] sm:$0xff] %v575
        %p580 = scmp.eq.s32.totalorder %s28, 1
        // Predicated region
        $region57: #{tpu_custom_call.1} parent=39 // pred_check
          %p581 = pneg %p580
        $region58: #{tpu_custom_call.1} parent=39 // pred_check_branch
          %583 = sbr.rel (%p581) target = $region60
        $region59: #{tpu_custom_call.1} parent=39 // pred_region
          %v584 = vld [vmem:[#allocation2] sm:$0xff]
          %v585 = vld [vmem:[#allocation2 + $0x8] sm:$0xff]
          %v586 = vld [vmem:[#allocation2 + $0x10] sm:$0xff]
          %v587 = vld [vmem:[#allocation2 + $0x18] sm:$0xff]
          %v588 = vld [vmem:[%s2] sm:$0x3]
          %v590 = vlaneseq
          %v591 = vshrl.u32 %v590, 7
          %v592 = vsub.s32 0, %v591
          %v593 = vrot.slane %v588, %v592
          %v594 = vlaneseq
          %v595 = vshrl.u32 %v594, 7
          %v596 = vsub.s32 1, %v595
          %v597 = vrot.slane %v588, %v596
          %v600 = vadd.f32 %v584, %v593
          %v601 = vadd.f32 %v585, %v597
          %v602 = vadd.f32 %v586, %v593
          %v603 = vadd.f32 %v587, %v597
          %v604 = vmax.f32 %v600, 0.0
          %v605 = vmax.f32 %v601, 0.0
          %v606 = vmax.f32 %v602, 0.0
          %v607 = vmax.f32 %v603, 0.0
          %v608 = vpack.c.bf16 %v606, %v604
          %v609 = vpack.c.bf16 %v607, %v605
          %v610 = vld [vmem:[#allocation8] sm:$0xf]
          %v611 = vld [vmem:[#allocation8 + $0x4] sm:$0xf]
          %v612 = vld [vmem:[#allocation8 + $0x8] sm:$0xf]
          %v613 = vld [vmem:[#allocation8 + $0xc] sm:$0xf]
          %v614 = vld [vmem:[#allocation8 + $0x10] sm:$0xf]
          %v615 = vld [vmem:[#allocation8 + $0x14] sm:$0xf]
          %v616 = vld [vmem:[#allocation8 + $0x18] sm:$0xf]
          %v617 = vld [vmem:[#allocation8 + $0x1c] sm:$0xf]
          %v618 = vld [vmem:[#allocation8 + $0x20] sm:$0xf]
          %v619 = vld [vmem:[#allocation8 + $0x24] sm:$0xf]
          %v620 = vld [vmem:[#allocation8 + $0x28] sm:$0xf]
          %v621 = vld [vmem:[#allocation8 + $0x2c] sm:$0xf]
          %v622 = vld [vmem:[#allocation8 + $0x30] sm:$0xf]
          %v623 = vld [vmem:[#allocation8 + $0x34] sm:$0xf]
          %v624 = vld [vmem:[#allocation8 + $0x38] sm:$0xf]
          %v625 = vld [vmem:[#allocation8 + $0x3c] sm:$0xf]
          %v626 = vld [vmem:[#allocation8 + $0x40] sm:$0xf]
          %v627 = vld [vmem:[#allocation8 + $0x44] sm:$0xf]
          %v628 = vld [vmem:[#allocation8 + $0x48] sm:$0xf]
          %v629 = vld [vmem:[#allocation8 + $0x4c] sm:$0xf]
          %v630 = vld [vmem:[#allocation8 + $0x50] sm:$0xf]
          %v631 = vld [vmem:[#allocation8 + $0x54] sm:$0xf]
          %v632 = vld [vmem:[#allocation8 + $0x58] sm:$0xf]
          %v633 = vld [vmem:[#allocation8 + $0x5c] sm:$0xf]
          %v634 = vld [vmem:[#allocation8 + $0x60] sm:$0xf]
          %v635 = vld [vmem:[#allocation8 + $0x64] sm:$0xf]
          %v636 = vld [vmem:[#allocation8 + $0x68] sm:$0xf]
          %v637 = vld [vmem:[#allocation8 + $0x6c] sm:$0xf]
          %v638 = vld [vmem:[#allocation8 + $0x70] sm:$0xf]
          %v639 = vld [vmem:[#allocation8 + $0x74] sm:$0xf]
          %v640 = vld [vmem:[#allocation8 + $0x78] sm:$0xf]
          %v641 = vld [vmem:[#allocation8 + $0x7c] sm:$0xf]
          %v642 = vld [vmem:[%s4] sm:$0x1]
          %v644 = vlaneseq
          %v645 = vshrl.u32 %v644, 7
          %v646 = vsub.s32 0, %v645
          %v647 = vrot.slane %v642, %v646
          %v681 = vunpack.c.l.b16 %v610
          %v682 = vunpack.c.l.b16 %v611
          %v683 = vunpack.c.l.b16 %v612
          %v684 = vunpack.c.l.b16 %v613
          %v685 = vunpack.c.l.b16 %v614
          %v686 = vunpack.c.l.b16 %v615
          %v687 = vunpack.c.l.b16 %v616
          %v688 = vunpack.c.l.b16 %v617
          %v689 = vunpack.c.l.b16 %v618
          %v690 = vunpack.c.l.b16 %v619
          %v691 = vunpack.c.l.b16 %v620
          %v692 = vunpack.c.l.b16 %v621
          %v693 = vunpack.c.l.b16 %v622
          %v694 = vunpack.c.l.b16 %v623
          %v695 = vunpack.c.l.b16 %v624
          %v696 = vunpack.c.l.b16 %v625
          %v697 = vunpack.c.l.b16 %v626
          %v698 = vunpack.c.l.b16 %v627
          %v699 = vunpack.c.l.b16 %v628
          %v700 = vunpack.c.l.b16 %v629
          %v701 = vunpack.c.l.b16 %v630
          %v702 = vunpack.c.l.b16 %v631
          %v703 = vunpack.c.l.b16 %v632
          %v704 = vunpack.c.l.b16 %v633
          %v705 = vunpack.c.l.b16 %v634
          %v706 = vunpack.c.l.b16 %v635
          %v707 = vunpack.c.l.b16 %v636
          %v708 = vunpack.c.l.b16 %v637
          %v709 = vunpack.c.l.b16 %v638
          %v710 = vunpack.c.l.b16 %v639
          %v711 = vunpack.c.l.b16 %v640
          %v712 = vunpack.c.l.b16 %v641
          %v713 = vpack.c.b16 %v682, %v681
          %v714 = vpack.c.b16 %v684, %v683
          %v715 = vpack.c.b16 %v686, %v685
          %v716 = vpack.c.b16 %v688, %v687
          %v717 = vpack.c.b16 %v690, %v689
          %v718 = vpack.c.b16 %v692, %v691
          %v719 = vpack.c.b16 %v694, %v693
          %v720 = vpack.c.b16 %v696, %v695
          %v721 = vpack.c.b16 %v698, %v697
          %v722 = vpack.c.b16 %v700, %v699
          %v723 = vpack.c.b16 %v702, %v701
          %v724 = vpack.c.b16 %v704, %v703
          %v725 = vpack.c.b16 %v706, %v705
          %v726 = vpack.c.b16 %v708, %v707
          %v727 = vpack.c.b16 %v710, %v709
          %v728 = vpack.c.b16 %v712, %v711
          %745 = vmatprep.subr.bf16.mxu0 0
          %746 = vmatpush1.bf16.msra.mxu0 %v713
          %747 = vmatprep.subr.bf16.mxu0 0
          %748 = vmatpush1.bf16.msra.mxu0 %v714
          %749 = vmatprep.subr.bf16.mxu0 0
          %750 = vmatpush1.bf16.msra.mxu0 %v715
          %751 = vmatprep.subr.bf16.mxu0 0
          %752 = vmatpush1.bf16.msra.mxu0 %v716
          %753 = vmatprep.subr.bf16.mxu0 0
          %754 = vmatpush1.bf16.msra.mxu0 %v717
          %755 = vmatprep.subr.bf16.mxu0 0
          %756 = vmatpush1.bf16.msra.mxu0 %v718
          %757 = vmatprep.subr.bf16.mxu0 0
          %758 = vmatpush1.bf16.msra.mxu0 %v719
          %759 = vmatprep.subr.bf16.mxu0 0
          %760 = vmatpush1.bf16.msra.mxu0 %v720
          %761 = vmatprep.subr.bf16.mxu0 0
          %762 = vmatpush1.bf16.msra.mxu0 %v721
          %763 = vmatprep.subr.bf16.mxu0 0
          %764 = vmatpush1.bf16.msra.mxu0 %v722
          %765 = vmatprep.subr.bf16.mxu0 0
          %766 = vmatpush1.bf16.msra.mxu0 %v723
          %767 = vmatprep.subr.bf16.mxu0 0
          %768 = vmatpush1.bf16.msra.mxu0 %v724
          %769 = vmatprep.subr.bf16.mxu0 0
          %770 = vmatpush1.bf16.msra.mxu0 %v725
          %771 = vmatprep.subr.bf16.mxu0 0
          %772 = vmatpush1.bf16.msra.mxu0 %v726
          %773 = vmatprep.subr.bf16.mxu0 0
          %774 = vmatpush1.bf16.msra.mxu0 %v727
          %775 = vmatprep.subr.bf16.mxu0 0
          %776 = vmatpush1.bf16.msra.mxu0 %v728
          %777 = vmatprep.mubr.bf16.mxu0 %v609
          %778 = vmatmul.mubr.bf16.gmra.mrb[0].mxu0 %v608
          %v779 = vpop.f32.mrb[0].mxu0
          %v780 = vadd.f32 %v647, %v779
          %v781 = vpop.f32.mrb[0].mxu0
          %v782 = vpop.f32.mrb[0].mxu0
          %v783 = vadd.f32 %v647, %v782
          %v784 = vpop.f32.mrb[0].mxu0
          %785 = vdwg.mxu0
          %786 = vst [vmem:[#allocation9] sm:$0xff] %v780
          %787 = vst [vmem:[#allocation9 + $0x8] sm:$0xff] %v783
        $region60: #{tpu_custom_call.1} parent=39 // pred_fallthru
          _
        // Predicated region
        $region61: #{tpu_custom_call.1} parent=39 // pred_check
          %p788 = pneg %p170
        $region62: #{tpu_custom_call.1} parent=39 // pred_check_branch
          %790 = sbr.rel (%p788) target = $region64
        $region63: #{tpu_custom_call.1} parent=39 // pred_region
          %s791 = smul.u32 2, %s27
          %s793 = ssub.s32 256, 256
          %794 = vsyncadd [#allocation5], %s793
          %s795 = smul.addr %s791, 128
          %s796 = scalar_lea.hbm %s5, %s795
          %s797 = sshll.u32 [#allocation9], 4
          %s798 = int_to_ptr.vmem [resolvable:$true] %s797
          %803 = dma.vmem_to_hbm [thread:$0]  %s798, 256, %s796, [#allocation5], 128, 128, 8
        $region64: #{tpu_custom_call.1} parent=39 // pred_fallthru
          _
        // Predicated region
        $region65: #{tpu_custom_call.1} parent=39 // pred_check
          %p804 = pneg %p170
        $region66: #{tpu_custom_call.1} parent=39 // pred_check_branch
          %806 = sbr.rel (%p804) target = $region68
        $region67: #{tpu_custom_call.1} parent=39 // pred_region
          %807 = dma.done [#allocation5], 256
        $region68: #{tpu_custom_call.1} parent=39 // pred_fallthru
          _
      $region40: #{tpu_custom_call.1} parent=5 // pred_fallthru
        _
      %p808 = scmp.le.s32.totalorder 2, %s18
      // Predicated region
      $region69: #{tpu_custom_call.1} parent=5 // pred_check
        %p809 = pneg %p808
      $region70: #{tpu_custom_call.1} parent=5 // pred_check_branch
        %811 = sbr.rel (%p809) target = $region72
      $region71: #{tpu_custom_call.1} parent=5 // pred_region
        %s812 = ssub.s32 %s18, 2
      $region72: #{tpu_custom_call.1} parent=5 // pred_fallthru
        _
    $region6: #{tpu_custom_call.1} parent=1 // loop_footer
      %s22 = sadd.s32 1, %s18
    $region7: #{tpu_custom_call.1} parent=1 // loop_footer_branch
      %17 = sbr.rel target = $region3
    $region8: #{tpu_custom_call.1} parent=1 // loop_exit
      _
    %813 = vsyncpa [#allocation4], 1
    %s814 = scalar_lea.sflag [#allocation4], 1
    %815 = vsyncpa %s814, 1
    %816 = vsyncpa [#allocation7], 1
    %s817 = scalar_lea.sflag [#allocation7], 1
    %818 = vsyncpa %s817, 1
    %819 = vsyncpa [#allocation5], 1
    %s820 = scalar_lea.sflag [#allocation5], 1
    %821 = vsyncpa %s820, 1

</llo_original>
